<compile_context>
chip_gen: v6e
topology: v6e:2x2x1
jax: 0.10.0
libtpu: 0.0.40
codegen_flags: <defaults>
</compile_context>

<pallas_src>
import jax
import jax.numpy as jnp
from jax import lax
from jax.experimental import pallas as pl
from jax.experimental.pallas import tpu as pltpu

HIDDEN1 = 50
HIDDEN2 = 20
LEAKY_SLOPE = 0.01          # torch.nn.LeakyReLU default
OUTPUT_SHIFT = 0.001
LANE = 128


def _leaky_relu(x):
    # max(x, slope*x) == LeakyReLU for 0 < slope < 1 (2 VPU ops instead of cmp+mul+sel)
    return jnp.maximum(x, LEAKY_SLOPE * x)


def _softplus(x):
    # numerically-stable softplus: max(x, 0) + log1p(exp(-|x|)); exp/log1p go to the EUP
    return jnp.maximum(x, 0.0) + jnp.log1p(jnp.exp(-jnp.abs(x)))


def flexible_var_kernel(z_ref, w1_ref, b1_ref, w2_ref, b2_ref, w3_ref, b3_ref, o_ref):
    """One batch tile.

    z_ref : (tile_b, d_in)   native row-major layout, caller's dtype (f32 or bf16)
    w*_ref: (out_f, in_f)    f32, resident in VMEM       b*_ref: (out_f, 1) f32
    o_ref : (tile_b, d_out)  f32, natural output layout
    """
    z = z_ref[...].astype(jnp.float32)

    # (HIDDEN1, tile_b): contract z's feature axis so the batch rides the 128-wide
    # lane axis for all elementwise / EUP work below.  The implied transpose of the
    # tiny (tile_b, d_in) block happens in-register (XLU), never in HBM.
    h1 = lax.dot_general(w1_ref[...], z, (((1,), (1,)), ((), ())),
                         preferred_element_type=jnp.float32) + b1_ref[...]
    h1 = _leaky_relu(h1)

    h2 = jnp.dot(w2_ref[...], h1, preferred_element_type=jnp.float32) + b2_ref[...]
    h2 = _leaky_relu(h2)

    h3 = jnp.dot(w3_ref[...], h2, preferred_element_type=jnp.float32) + b3_ref[...]
    y = _softplus(h3) + OUTPUT_SHIFT              # (d_out, tile_b), lane-dense math

    # Natural-layout store; d_out is tiny, so the masked (lane-sparse) store is
    # negligible and it saves a whole extra XLA slice+transpose pass over the output.
    o_ref[...] = y.T.astype(o_ref.dtype)


def _round_up(x, m):
    return ((x + m - 1) // m) * m


def _num_tensorcores():
    """TensorCores a ("parallel",) grid axis can be sharded across (megacore / v7x)."""
    try:
        kind = str(getattr(jax.devices()[0], "device_kind", "")).lower()
    except Exception:
        return 1
    if any(tag in kind for tag in ("v7", "7x", "v4", "v5p")):
        return 2
    return 1


def _vmem_bytes_per_row(z_itemsize):
    """Conservative per-batch-row VMEM bound for one tile.

    Lane-padded (tile_b, d_in) input x2 buffers, lane-padded (tile_b, d_out) output
    x2 buffers, the f32 copy of the loaded z block, the transposed result before the
    store, and the (features, batch)-layout f32 intermediates (h1/h2/h3).
    """
    return (2 * LANE * z_itemsize          # z double-buffered input block
            + 2 * LANE * 4                 # output double-buffered block (f32)
            + LANE * 4                     # f32 copy of the loaded z block
            + LANE * 4                     # transposed (tile_b, d_out) value
            + 512)                         # h1/h2/h3 + activation temps (f32)


def _choose_tile(batch, z_itemsize, num_cores, max_tile_b, vmem_budget):
    """Largest lane-aligned batch tile within the VMEM budget; one tile per TC."""
    aligned = _round_up(max(batch, 1), LANE)
    per_row = _vmem_bytes_per_row(z_itemsize)
    vmem_cap = max(LANE, (vmem_budget // per_row) // LANE * LANE)
    tile = min(max_tile_b, vmem_cap)
    if num_cores >= 2:
        # v7x / megacore: aim for one big tile per TensorCore when it fits.
        per_core = _round_up(-(-aligned // num_cores), LANE)
        tile = min(tile, per_core)
    else:
        # Single TC: the grid is a serial loop, never split a batch that already fits.
        tile = min(tile, aligned)
    return tile, per_row


def flexible_var_network(z, params, *, max_tile_b=8192):
    """Forward pass. z: (batch, input_dim) (f32 or bf16). Returns (batch, output_dim) f32."""
    w1, b1, w2, b2, w3, b3 = params
    B, d_in = z.shape
    d_out = w3.shape[1]
    z_itemsize = jnp.dtype(z.dtype).itemsize

    num_cores = _num_tensorcores()
    tile_b, per_row = _choose_tile(B, z_itemsize, num_cores, max_tile_b,
                                   vmem_budget=40 << 20)
    grid = (pl.cdiv(B, tile_b),)

    # Tiny f32 weights / biases, resident in VMEM for the whole grid (no re-DMA).
    w1t = jnp.asarray(w1, jnp.float32).T                 # (HIDDEN1, d_in)
    w2t = jnp.asarray(w2, jnp.float32).T                 # (HIDDEN2, HIDDEN1)
    w3t = jnp.asarray(w3, jnp.float32).T                 # (d_out,  HIDDEN2)
    b1c = jnp.asarray(b1, jnp.float32).reshape(HIDDEN1, 1)
    b2c = jnp.asarray(b2, jnp.float32).reshape(HIDDEN2, 1)
    b3c = jnp.asarray(b3, jnp.float32).reshape(d_out, 1)

    n_wparams = d_in * HIDDEN1 + HIDDEN1 * HIDDEN2 + HIDDEN2 * d_out
    cost = pl.CostEstimate(
        flops=2 * B * n_wparams,
        transcendentals=2 * B * d_out,                   # exp + log1p per output elem
        bytes_accessed=(B * d_in * z_itemsize            # z read (dominant)
                        + B * d_out * 4                  # output write
                        + n_wparams * 4
                        + (HIDDEN1 + HIDDEN2 + d_out) * 4),
    )

    vmem_limit = int(min(48 << 20, max(32 << 20, tile_b * per_row + (4 << 20))))
    vmem_spec = pl.BlockSpec(memory_space=pltpu.MemorySpace.VMEM)

    return pl.pallas_call(
        flexible_var_kernel,
        out_shape=jax.ShapeDtypeStruct((B, d_out), jnp.float32),
        grid_spec=pltpu.PrefetchScalarGridSpec(
            num_scalar_prefetch=0,
            grid=grid,
            in_specs=[
                pl.BlockSpec((tile_b, d_in), lambda i: (i, 0)),   # z tile, native layout
                vmem_spec,   # W1^T
                vmem_spec,   # b1
                vmem_spec,   # W2^T
                vmem_spec,   # b2
                vmem_spec,   # W3^T
                vmem_spec,   # b3
            ],
            out_specs=pl.BlockSpec((tile_b, d_out), lambda i: (i, 0)),
        ),
        compiler_params=pltpu.CompilerParams(
            dimension_semantics=("parallel",),
            vmem_limit_bytes=vmem_limit,
        ),
        cost_estimate=cost,
    )(z, w1t, b1c, w2t, b2c, w3t, b3c)


def init_params(key, input_dim, output_dim):
    """Deterministic init mimicking torch.nn.Linear default U[-1/sqrt(fan_in), 1/sqrt(fan_in)]."""
    def linear(key, fan_in, fan_out):
        kw, kb = jax.random.split(key)
        bound = 1.0 / jnp.sqrt(jnp.asarray(fan_in, jnp.float32))
        w = jax.random.uniform(kw, (fan_in, fan_out), jnp.float32, -bound, bound)
        b = jax.random.uniform(kb, (fan_out,), jnp.float32, -bound, bound)
        return w, b

    k1, k2, k3 = jax.random.split(key, 3)
    w1, b1 = linear(k1, input_dim, HIDDEN1)
    w2, b2 = linear(k2, HIDDEN1, HIDDEN2)
    w3, b3 = linear(k3, HIDDEN2, output_dim)
    return (w1, b1, w2, b2, w3, b3)


def reference_forward(z, params):
    """Pure-JAX reference for correctness checking."""
    w1, b1, w2, b2, w3, b3 = params
    h = jax.nn.leaky_relu(z @ w1 + b1, LEAKY_SLOPE)
    h = jax.nn.leaky_relu(h @ w2 + b2, LEAKY_SLOPE)
    h = h @ w3 + b3
    return jax.nn.softplus(h) + OUTPUT_SHIFT


if __name__ == "__main__":
    key = jax.random.PRNGKey(0)
    k_params, k_z1, k_z2 = jax.random.split(key, 3)

    input_dim, output_dim = 4, 3
    params = init_params(k_params, input_dim, output_dim)

    # Small batch: one partial 128-row tile (exercises Pallas partial-block handling).
    z_small = jax.random.normal(k_z1, (8, input_dim), jnp.float32)
    out_small = jax.block_until_ready(flexible_var_network(z_small, params))
    ref_small = reference_forward(z_small, params)
    assert out_small.shape == (8, output_dim)
    assert jnp.allclose(out_small, ref_small, atol=1e-4, rtol=1e-4), "f32 mismatch (small)"

    # Ragged batch (not a tile multiple): tail block handled by Pallas, no wrapper pad.
    z_big = jax.random.normal(k_z2, (300, input_dim), jnp.float32)
    out_big = jax.block_until_ready(flexible_var_network(z_big, params))
    ref_big = reference_forward(z_big, params)
    assert out_big.shape == (300, output_dim)
    assert jnp.allclose(out_big, ref_big, atol=1e-4, rtol=1e-4), "f32 mismatch (big)"

    # bf16 z path: caller provides bf16 to halve the dominant HBM read; weights,
    # MXU accumulation and activation math stay f32 inside the kernel.
    out_bf16 = jax.block_until_ready(
        flexible_var_network(z_big.astype(jnp.bfloat16), params))
    assert out_bf16.shape == (300, output_dim)
    assert jnp.allclose(out_bf16, ref_big, atol=1e-1, rtol=1e-1), "bf16 mismatch"

    print("KERNEL_OK")
</pallas_src>

<mosaic_0001>
module attributes {stable_mosaic.version = 11 : i64} {
  func.func @flexible_var_kernel(%arg0: i32, %arg1: memref<128x4xf32, #tpu.memory_space<vmem>>, %arg2: memref<50x4xf32, #tpu.memory_space<vmem>>, %arg3: memref<50x1xf32, #tpu.memory_space<vmem>>, %arg4: memref<20x50xf32, #tpu.memory_space<vmem>>, %arg5: memref<20x1xf32, #tpu.memory_space<vmem>>, %arg6: memref<3x20xf32, #tpu.memory_space<vmem>>, %arg7: memref<3x1xf32, #tpu.memory_space<vmem>>, %arg8: memref<128x3xf32, #tpu.memory_space<vmem>>) attributes {dimension_semantics = [#tpu.dimension_semantics<parallel>], iteration_bounds = array<i64: 1>, scalar_prefetch = 0 : i64, scratch_operands = 0 : i64, tpu.core_type = #tpu.core_type<tc>, window_params = [{transform_indices = @transform_0, window_bounds = array<i64: 128, 4>}, {pipeline_mode = #tpu.pipeline_mode<synchronous>, transform_indices = @transform_1, window_bounds = array<i64: 50, 4>}, {pipeline_mode = #tpu.pipeline_mode<synchronous>, transform_indices = @transform_2, window_bounds = array<i64: 50, 1>}, {pipeline_mode = #tpu.pipeline_mode<synchronous>, transform_indices = @transform_3, window_bounds = array<i64: 20, 50>}, {pipeline_mode = #tpu.pipeline_mode<synchronous>, transform_indices = @transform_4, window_bounds = array<i64: 20, 1>}, {pipeline_mode = #tpu.pipeline_mode<synchronous>, transform_indices = @transform_5, window_bounds = array<i64: 3, 20>}, {pipeline_mode = #tpu.pipeline_mode<synchronous>, transform_indices = @transform_6, window_bounds = array<i64: 3, 1>}, {transform_indices = @transform_7, window_bounds = array<i64: 128, 3>}]} {
    %c0 = arith.constant 0 : index
    %c0_0 = arith.constant 0 : index
    %0 = vector.load %arg1[%c0, %c0_0] : memref<128x4xf32, #tpu.memory_space<vmem>>, vector<128x4xf32>
    %c0_1 = arith.constant 0 : index
    %c0_2 = arith.constant 0 : index
    %1 = vector.load %arg2[%c0_1, %c0_2] : memref<50x4xf32, #tpu.memory_space<vmem>>, vector<50x4xf32>
    %cst = arith.constant dense<0.000000e+00> : vector<50x128xf32>
    %2 = tpu.matmul %1, %0, %cst {dimension_numbers = #tpu.dot_dimension_numbers<[1], [1], [0], [0], [0, 0, 1, 0], [], []>} : vector<50x4xf32>, vector<128x4xf32>, vector<50x128xf32> -> vector<50x128xf32>
    %c0_3 = arith.constant 0 : index
    %c0_4 = arith.constant 0 : index
    %3 = vector.load %arg3[%c0_3, %c0_4] : memref<50x1xf32, #tpu.memory_space<vmem>>, vector<50x1xf32>
    %4 = vector.broadcast %3 : vector<50x1xf32> to vector<50x128xf32>
    %5 = arith.addf %2, %4 : vector<50x128xf32>
    %cst_5 = arith.constant 0.00999999977 : f32
    %6 = vector.broadcast %cst_5 : f32 to vector<50x128xf32>
    %7 = arith.mulf %6, %5 : vector<50x128xf32>
    %8 = arith.maximumf %5, %7 : vector<50x128xf32>
    %c0_6 = arith.constant 0 : index
    %c0_7 = arith.constant 0 : index
    %9 = vector.load %arg4[%c0_6, %c0_7] : memref<20x50xf32, #tpu.memory_space<vmem>>, vector<20x50xf32>
    %cst_8 = arith.constant dense<0.000000e+00> : vector<20x128xf32>
    %10 = tpu.matmul %9, %8, %cst_8 {dimension_numbers = #tpu.dot_dimension_numbers<[1], [0], [0], [1], [0, 0, 1, 1], [], []>} : vector<20x50xf32>, vector<50x128xf32>, vector<20x128xf32> -> vector<20x128xf32>
    %c0_9 = arith.constant 0 : index
    %c0_10 = arith.constant 0 : index
    %11 = vector.load %arg5[%c0_9, %c0_10] : memref<20x1xf32, #tpu.memory_space<vmem>>, vector<20x1xf32>
    %12 = vector.broadcast %11 : vector<20x1xf32> to vector<20x128xf32>
    %13 = arith.addf %10, %12 : vector<20x128xf32>
    %cst_11 = arith.constant 0.00999999977 : f32
    %14 = vector.broadcast %cst_11 : f32 to vector<20x128xf32>
    %15 = arith.mulf %14, %13 : vector<20x128xf32>
    %16 = arith.maximumf %13, %15 : vector<20x128xf32>
    %c0_12 = arith.constant 0 : index
    %c0_13 = arith.constant 0 : index
    %17 = vector.load %arg6[%c0_12, %c0_13] : memref<3x20xf32, #tpu.memory_space<vmem>>, vector<3x20xf32>
    %cst_14 = arith.constant dense<0.000000e+00> : vector<3x128xf32>
    %18 = tpu.matmul %17, %16, %cst_14 {dimension_numbers = #tpu.dot_dimension_numbers<[1], [0], [0], [1], [0, 0, 1, 1], [], []>} : vector<3x20xf32>, vector<20x128xf32>, vector<3x128xf32> -> vector<3x128xf32>
    %c0_15 = arith.constant 0 : index
    %c0_16 = arith.constant 0 : index
    %19 = vector.load %arg7[%c0_15, %c0_16] : memref<3x1xf32, #tpu.memory_space<vmem>>, vector<3x1xf32>
    %20 = vector.broadcast %19 : vector<3x1xf32> to vector<3x128xf32>
    %21 = arith.addf %18, %20 : vector<3x128xf32>
    %cst_17 = arith.constant 0.000000e+00 : f32
    %22 = vector.broadcast %cst_17 : f32 to vector<3x128xf32>
    %23 = arith.maximumf %21, %22 : vector<3x128xf32>
    %24 = math.absf %21 : vector<3x128xf32>
    %cst_18 = arith.constant 0.000000e+00 : f32
    %25 = vector.broadcast %cst_18 : f32 to vector<3x128xf32>
    %26 = arith.subf %25, %24 : vector<3x128xf32>
    %27 = math.exp %26 : vector<3x128xf32>
    %28 = math.log1p %27 : vector<3x128xf32>
    %29 = arith.addf %23, %28 : vector<3x128xf32>
    %cst_19 = arith.constant 1.000000e-03 : f32
    %30 = vector.broadcast %cst_19 : f32 to vector<3x128xf32>
    %31 = arith.addf %29, %30 : vector<3x128xf32>
    %32 = tpu.transpose %31, [1, 0] : vector<3x128xf32> -> vector<128x3xf32>
    %c0_20 = arith.constant 0 : index
    %c0_21 = arith.constant 0 : index
    %33 = vector.load %arg8[%c0_20, %c0_21] : memref<128x3xf32, #tpu.memory_space<vmem>>, vector<128x3xf32>
    tpu.vector_store %arg8[%c0_20, %c0_21], %32 {strides = array<i32>} : memref<128x3xf32, #tpu.memory_space<vmem>>, vector<128x3xf32>,
    return
  }
  func.func @transform_0(%arg0: i32) -> (i32, i32) {
    %c0_i32 = arith.constant 0 : i32
    %c0_i32_0 = arith.constant 0 : i32
    return %arg0, %c0_i32 : i32, i32
  }
  func.func @transform_1(%arg0: i32) -> (i32, i32) {
    %c0_i32 = arith.constant 0 : i32
    %c0_i32_0 = arith.constant 0 : i32
    %c0_i32_1 = arith.constant 0 : i32
    return %c0_i32, %c0_i32_0 : i32, i32
  }
  func.func @transform_2(%arg0: i32) -> (i32, i32) {
    %c0_i32 = arith.constant 0 : i32
    %c0_i32_0 = arith.constant 0 : i32
    %c0_i32_1 = arith.constant 0 : i32
    return %c0_i32, %c0_i32_0 : i32, i32
  }
  func.func @transform_3(%arg0: i32) -> (i32, i32) {
    %c0_i32 = arith.constant 0 : i32
    %c0_i32_0 = arith.constant 0 : i32
    %c0_i32_1 = arith.constant 0 : i32
    return %c0_i32, %c0_i32_0 : i32, i32
  }
  func.func @transform_4(%arg0: i32) -> (i32, i32) {
    %c0_i32 = arith.constant 0 : i32
    %c0_i32_0 = arith.constant 0 : i32
    %c0_i32_1 = arith.constant 0 : i32
    return %c0_i32, %c0_i32_0 : i32, i32
  }
  func.func @transform_5(%arg0: i32) -> (i32, i32) {
    %c0_i32 = arith.constant 0 : i32
    %c0_i32_0 = arith.constant 0 : i32
    %c0_i32_1 = arith.constant 0 : i32
    return %c0_i32, %c0_i32_0 : i32, i32
  }
  func.func @transform_6(%arg0: i32) -> (i32, i32) {
    %c0_i32 = arith.constant 0 : i32
    %c0_i32_0 = arith.constant 0 : i32
    %c0_i32_1 = arith.constant 0 : i32
    return %c0_i32, %c0_i32_0 : i32, i32
  }
  func.func @transform_7(%arg0: i32) -> (i32, i32) {
    %c0_i32 = arith.constant 0 : i32
    %c0_i32_0 = arith.constant 0 : i32
    return %arg0, %c0_i32 : i32, i32
  }
}

</mosaic_0001>

<llo_original>
// kernel: tpu_custom_call.1
$region0: #{tpu_custom_call.1}
  #allocation0 [shape = 'u32[]', space=smem, size = 0x4, offset = 0x4, fixed_abs, tag = 'smem constant byte address 0x4 - core index']
  #allocation1 [shape = 'u32[144,128]{1,0:T(1,128)}', space=vmem, size = 0x12000, scoped, tag = 'internal scratch']
  %s0 = inlined_call_operand.vmem [shape: f32[8,4], index: 0, kind: input, shape index: {}]
  %s1 = inlined_call_operand.vmem [shape: f32[50,4], index: 1, kind: input, shape index: {}]
  %s2 = inlined_call_operand.vmem [shape: f32[50,1], index: 2, kind: input, shape index: {}]
  %s3 = inlined_call_operand.vmem [shape: f32[20,50], index: 3, kind: input, shape index: {}]
  %s4 = inlined_call_operand.vmem [shape: f32[20,1], index: 4, kind: input, shape index: {}]
  %s5 = inlined_call_operand.vmem [shape: f32[3,20], index: 5, kind: input, shape index: {}]
  %s6 = inlined_call_operand.vmem [shape: f32[3,1], index: 6, kind: input, shape index: {}]
  %s7 = inlined_call_operand.vmem [shape: f32[8,3], index: 7, kind: output, shape index: {}]
  %s8 = sld [smem:[#allocation0]]
  $region72: #{tpu_custom_call.1} parent=0
    _
  %s10 = ssub.s32 1, %s8
  %s11 = scalar_select 0, %s10, %s8
  $region1: #{tpu_custom_call.1} parent=0
    #allocation2 [shape = 'u8[65536]{0}', space=vmem, size = 0x10000, scoped, tag = 'output window, operand 0, single buffered']
    // Predicated region
    $region2: #{tpu_custom_call.1} parent=1 // pred_check
      _
    $region3: #{tpu_custom_call.1} parent=1 // pred_check_branch
      %13 = sbr.rel (0) target = $region5
    $region4: #{tpu_custom_call.1} parent=1 // pred_region
      _
    $region5: #{tpu_custom_call.1} parent=1 // pred_fallthru
      _
    // Predicated region
    $region6: #{tpu_custom_call.1} parent=1 // pred_check
      _
    $region7: #{tpu_custom_call.1} parent=1 // pred_check_branch
      %15 = sbr.rel (0) target = $region9
    $region8: #{tpu_custom_call.1} parent=1 // pred_region
      _
    $region9: #{tpu_custom_call.1} parent=1 // pred_fallthru
      _
    // Predicated region
    $region10: #{tpu_custom_call.1} parent=1 // pred_check
      _
    $region11: #{tpu_custom_call.1} parent=1 // pred_check_branch
      %17 = sbr.rel (0) target = $region13
    $region12: #{tpu_custom_call.1} parent=1 // pred_region
      _
    $region13: #{tpu_custom_call.1} parent=1 // pred_fallthru
      _
    // Predicated region
    $region14: #{tpu_custom_call.1} parent=1 // pred_check
      _
    $region15: #{tpu_custom_call.1} parent=1 // pred_check_branch
      %19 = sbr.rel (0) target = $region17
    $region16: #{tpu_custom_call.1} parent=1 // pred_region
      _
    $region17: #{tpu_custom_call.1} parent=1 // pred_fallthru
      _
    // Predicated region
    $region18: #{tpu_custom_call.1} parent=1 // pred_check
      _
    $region19: #{tpu_custom_call.1} parent=1 // pred_check_branch
      %21 = sbr.rel (0) target = $region21
    $region20: #{tpu_custom_call.1} parent=1 // pred_region
      _
    $region21: #{tpu_custom_call.1} parent=1 // pred_fallthru
      _
    // Predicated region
    $region22: #{tpu_custom_call.1} parent=1 // pred_check
      _
    $region23: #{tpu_custom_call.1} parent=1 // pred_check_branch
      %23 = sbr.rel (0) target = $region25
    $region24: #{tpu_custom_call.1} parent=1 // pred_region
      _
    $region25: #{tpu_custom_call.1} parent=1 // pred_fallthru
      _
    // Predicated region
    $region26: #{tpu_custom_call.1} parent=1 // pred_check
      _
    $region27: #{tpu_custom_call.1} parent=1 // pred_check_branch
      %25 = sbr.rel (0) target = $region29
    $region28: #{tpu_custom_call.1} parent=1 // pred_region
      _
    $region29: #{tpu_custom_call.1} parent=1 // pred_fallthru
      _
    %v26 = vld [vmem:[%s0] sm:$0xff]
    %v27 = vld [vmem:[%s0 + $0x8] sm:$0xff]
    %v28 = vld [vmem:[%s0 + $0x10] sm:$0xff]
    %v29 = vld [vmem:[%s0 + $0x18] sm:$0xff]
    %v30 = vld [vmem:[%s0 + $0x20] sm:$0xff]
    %v31 = vld [vmem:[%s0 + $0x28] sm:$0xff]
    %v32 = vld [vmem:[%s0 + $0x30] sm:$0xff]
    %v33 = vld [vmem:[%s0 + $0x38] sm:$0xff]
    %v34 = vld [vmem:[%s0 + $0x40] sm:$0xff]
    %v35 = vld [vmem:[%s0 + $0x48] sm:$0xff]
    %v36 = vld [vmem:[%s0 + $0x50] sm:$0xff]
    %v37 = vld [vmem:[%s0 + $0x58] sm:$0xff]
    %v38 = vld [vmem:[%s0 + $0x60] sm:$0xff]
    %v39 = vld [vmem:[%s0 + $0x68] sm:$0xff]
    %v40 = vld [vmem:[%s0 + $0x70] sm:$0xff]
    %v41 = vld [vmem:[%s0 + $0x78] sm:$0xff]
    %v42 = vld [vmem:[%s1] sm:$0xff]
    %v43 = vld [vmem:[%s1 + $0x8] sm:$0xff]
    %v44 = vld [vmem:[%s1 + $0x10] sm:$0xff]
    %v45 = vld [vmem:[%s1 + $0x18] sm:$0xff]
    %v46 = vld [vmem:[%s1 + $0x20] sm:$0xff]
    %v47 = vld [vmem:[%s1 + $0x28] sm:$0xff]
    %v48 = vld [vmem:[%s1 + $0x30] sm:$0x3]
    %v49 = vld [vmem:[%s2] sm:$0xff]
    %v50 = vld [vmem:[%s2 + $0x8] sm:$0xff]
    %v51 = vld [vmem:[%s2 + $0x10] sm:$0xff]
    %v52 = vld [vmem:[%s2 + $0x18] sm:$0xff]
    %v53 = vld [vmem:[%s2 + $0x20] sm:$0xff]
    %v54 = vld [vmem:[%s2 + $0x28] sm:$0xff]
    %v55 = vld [vmem:[%s2 + $0x30] sm:$0x3]
    %57 = vset.pattern.permute.xlu0 0
    %58 = vperm.xlu0 %57, %v49
    %v59 = vpop.permute.xlu0 %58
    %62 = vset.pattern.permute.xlu0 0
    %63 = vperm.xlu0 %62, %v50
    %v64 = vpop.permute.xlu0 %63
    %67 = vset.pattern.permute.xlu0 0
    %68 = vperm.xlu0 %67, %v51
    %v69 = vpop.permute.xlu0 %68
    %72 = vset.pattern.permute.xlu0 0
    %73 = vperm.xlu0 %72, %v52
    %v74 = vpop.permute.xlu0 %73
    %77 = vset.pattern.permute.xlu0 0
    %78 = vperm.xlu0 %77, %v53
    %v79 = vpop.permute.xlu0 %78
    %82 = vset.pattern.permute.xlu0 0
    %83 = vperm.xlu0 %82, %v54
    %v84 = vpop.permute.xlu0 %83
    %87 = vset.pattern.permute.xlu0 0
    %88 = vperm.xlu0 %87, %v55
    %v89 = vpop.permute.xlu0 %88
    %vm91 = vcmask 31744
    %v93 = vsel %vm91, %v42, 0
    %v96 = vsel %vm91, %v43, 0
    %v99 = vsel %vm91, %v44, 0
    %v102 = vsel %vm91, %v45, 0
    %v105 = vsel %vm91, %v46, 0
    %v108 = vsel %vm91, %v47, 0
    %v111 = vsel %vm91, %v48, 0
    %v114 = vsel %vm91, %v26, 0
    %v117 = vsel %vm91, %v27, 0
    %v120 = vsel %vm91, %v28, 0
    %v123 = vsel %vm91, %v29, 0
    %v126 = vsel %vm91, %v30, 0
    %v129 = vsel %vm91, %v31, 0
    %v132 = vsel %vm91, %v32, 0
    %v135 = vsel %vm91, %v33, 0
    %v138 = vsel %vm91, %v34, 0
    %v141 = vsel %vm91, %v35, 0
    %v144 = vsel %vm91, %v36, 0
    %v147 = vsel %vm91, %v37, 0
    %v150 = vsel %vm91, %v38, 0
    %v153 = vsel %vm91, %v39, 0
    %v156 = vsel %vm91, %v40, 0
    %v159 = vsel %vm91, %v41, 0
    %161 = vmatprep.subr.mxu0 0.0
    %162 = vmatpush1.xpose.msra.mxu0 %v159
    %163 = vmatprep.subr.mxu0 0.0
    %164 = vmatpush1.xpose.msra.mxu0 %v156
    %165 = vmatprep.subr.mxu0 0.0
    %166 = vmatpush1.xpose.msra.mxu0 %v153
    %167 = vmatprep.subr.mxu0 0.0
    %168 = vmatpush1.xpose.msra.mxu0 %v150
    %169 = vmatprep.subr.mxu0 0.0
    %170 = vmatpush1.xpose.msra.mxu0 %v147
    %171 = vmatprep.subr.mxu0 0.0
    %172 = vmatpush1.xpose.msra.mxu0 %v144
    %173 = vmatprep.subr.mxu0 0.0
    %174 = vmatpush1.xpose.msra.mxu0 %v141
    %175 = vmatprep.subr.mxu0 0.0
    %176 = vmatpush1.xpose.msra.mxu0 %v138
    %177 = vmatprep.subr.mxu0 0.0
    %178 = vmatpush1.xpose.msra.mxu0 %v135
    %179 = vmatprep.subr.mxu0 0.0
    %180 = vmatpush1.xpose.msra.mxu0 %v132
    %181 = vmatprep.subr.mxu0 0.0
    %182 = vmatpush1.xpose.msra.mxu0 %v129
    %183 = vmatprep.subr.mxu0 0.0
    %184 = vmatpush1.xpose.msra.mxu0 %v126
    %185 = vmatprep.subr.mxu0 0.0
    %186 = vmatpush1.xpose.msra.mxu0 %v123
    %187 = vmatprep.subr.mxu0 0.0
    %188 = vmatpush1.xpose.msra.mxu0 %v120
    %189 = vmatprep.subr.mxu0 0.0
    %190 = vmatpush1.xpose.msra.mxu0 %v117
    %191 = vmatprep.subr.mxu0 0.0
    %192 = vmatpush1.xpose.msra.mxu0 %v114
    %193 = vmatprep.subr.mxu0 0.0
    %194 = vmatpush2.xpose.msra.mxu0 0.0
    %195 = vmatprep.subr.mxu0 0.0
    %196 = vmatpush2.xpose.msra.mxu0 0.0
    %197 = vmatprep.subr.mxu0 0.0
    %198 = vmatpush2.xpose.msra.mxu0 0.0
    %199 = vmatprep.subr.mxu0 0.0
    %200 = vmatpush2.xpose.msra.mxu0 0.0
    %201 = vmatprep.subr.mxu0 0.0
    %202 = vmatpush2.xpose.msra.mxu0 0.0
    %203 = vmatprep.subr.mxu0 0.0
    %204 = vmatpush2.xpose.msra.mxu0 0.0
    %205 = vmatprep.subr.mxu0 0.0
    %206 = vmatpush2.xpose.msra.mxu0 0.0
    %207 = vmatprep.subr.mxu0 0.0
    %208 = vmatpush2.xpose.msra.mxu0 0.0
    %209 = vmatprep.subr.mxu0 0.0
    %210 = vmatpush2.xpose.msra.mxu0 0.0
    %211 = vmatprep.subr.mxu0 0.0
    %212 = vmatpush2.xpose.msra.mxu0 0.0
    %213 = vmatprep.subr.mxu0 0.0
    %214 = vmatpush2.xpose.msra.mxu0 0.0
    %215 = vmatprep.subr.mxu0 0.0
    %216 = vmatpush2.xpose.msra.mxu0 0.0
    %217 = vmatprep.subr.mxu0 0.0
    %218 = vmatpush2.xpose.msra.mxu0 0.0
    %219 = vmatprep.subr.mxu0 0.0
    %220 = vmatpush2.xpose.msra.mxu0 0.0
    %221 = vmatprep.subr.mxu0 0.0
    %222 = vmatpush2.xpose.msra.mxu0 0.0
    %223 = vmatprep.subr.mxu0 0.0
    %224 = vmatpush2.xpose.msra.mxu0 0.0
    %225 = vmatprep.mubr.f32.mxu0 0.0
    %226 = vmatmul.mubr.f32.gmra.mxu0 %v93
    %v227 = vpop.f32.mrf.mxu0
    %v228 = vadd.f32 %v59, %v227
    %v229 = vpop.f32.mrf.mxu0
    %230 = vmatprep.mubr.f32.mxu0 0.0
    %231 = vmatmul.mubr.f32.gmra.mxu0 %v96
    %v232 = vpop.f32.mrf.mxu0
    %v233 = vadd.f32 %v64, %v232
    %v234 = vpop.f32.mrf.mxu0
    %235 = vmatprep.mubr.f32.mxu0 0.0
    %236 = vmatmul.mubr.f32.gmra.mxu0 %v99
    %v237 = vpop.f32.mrf.mxu0
    %v238 = vadd.f32 %v69, %v237
    %v239 = vpop.f32.mrf.mxu0
    %240 = vmatprep.mubr.f32.mxu0 0.0
    %241 = vmatmul.mubr.f32.gmra.mxu0 %v102
    %v242 = vpop.f32.mrf.mxu0
    %v243 = vadd.f32 %v74, %v242
    %v244 = vpop.f32.mrf.mxu0
    %245 = vmatprep.mubr.f32.mxu0 0.0
    %246 = vmatmul.mubr.f32.gmra.mxu0 %v105
    %v247 = vpop.f32.mrf.mxu0
    %v248 = vadd.f32 %v79, %v247
    %v249 = vpop.f32.mrf.mxu0
    %250 = vmatprep.mubr.f32.mxu0 0.0
    %251 = vmatmul.mubr.f32.gmra.mxu0 %v108
    %v252 = vpop.f32.mrf.mxu0
    %v253 = vadd.f32 %v84, %v252
    %v254 = vpop.f32.mrf.mxu0
    %255 = vmatprep.mubr.f32.mxu0 0.0
    %256 = vmatmul.mubr.f32.gmra.mxu0 %v111
    %v257 = vpop.f32.mrf.mxu0
    %v258 = vadd.f32 %v89, %v257
    %v259 = vpop.f32.mrf.mxu0
    %260 = vdwg.mxu0
    %v261 = vmul.f32 %v228, 0.01
    %v262 = vmul.f32 %v233, 0.01
    %v263 = vmul.f32 %v238, 0.01
    %v264 = vmul.f32 %v243, 0.01
    %v265 = vmul.f32 %v248, 0.01
    %v266 = vmul.f32 %v253, 0.01
    %v267 = vmul.f32 %v258, 0.01
    %v268 = vmax.f32 %v228, %v261
    %v269 = vmax.f32 %v233, %v262
    %v270 = vmax.f32 %v238, %v263
    %v271 = vmax.f32 %v243, %v264
    %v272 = vmax.f32 %v248, %v265
    %v273 = vmax.f32 %v253, %v266
    %v274 = vmax.f32 %v258, %v267
    %v275 = vld [vmem:[%s3] sm:$0xff]
    %v276 = vld [vmem:[%s3 + $0x8] sm:$0xff]
    %v277 = vld [vmem:[%s3 + $0x10] sm:$0xf]
    %v278 = vld [vmem:[%s4] sm:$0xff]
    %v279 = vld [vmem:[%s4 + $0x8] sm:$0xff]
    %v280 = vld [vmem:[%s4 + $0x10] sm:$0xf]
    %282 = vset.pattern.permute.xlu0 0
    %283 = vperm.xlu0 %282, %v278
    %v284 = vpop.permute.xlu0 %283
    %287 = vset.pattern.permute.xlu0 0
    %288 = vperm.xlu0 %287, %v279
    %v289 = vpop.permute.xlu0 %288
    %292 = vset.pattern.permute.xlu0 0
    %293 = vperm.xlu0 %292, %v280
    %v294 = vpop.permute.xlu0 %293
    %vm296 = vcmask 408576
    %v298 = vsel %vm296, %v275, 0
    %v301 = vsel %vm296, %v276, 0
    %v304 = vsel %vm296, %v277, 0
    %vm306 = vcmask 1041408
    %v308 = vsel %vm306, %v274, 0
    %310 = vmatprep.subr.mxu0 0.0
    %311 = vmatpush1.msra.mxu0 0.0
    %312 = vmatprep.subr.mxu0 0.0
    %313 = vmatpush1.msra.mxu0 0.0
    %314 = vmatprep.subr.mxu0 0.0
    %315 = vmatpush1.msra.mxu0 0.0
    %316 = vmatprep.subr.mxu0 0.0
    %317 = vmatpush1.msra.mxu0 0.0
    %318 = vmatprep.subr.mxu0 0.0
    %319 = vmatpush1.msra.mxu0 0.0
    %320 = vmatprep.subr.mxu0 0.0
    %321 = vmatpush1.msra.mxu0 0.0
    %322 = vmatprep.subr.mxu0 0.0
    %323 = vmatpush1.msra.mxu0 0.0
    %324 = vmatprep.subr.mxu0 0.0
    %325 = vmatpush1.msra.mxu0 0.0
    %326 = vmatprep.subr.mxu0 0.0
    %327 = vmatpush1.msra.mxu0 0.0
    %328 = vmatprep.subr.mxu0 0.0
    %329 = vmatpush1.msra.mxu0 %v308
    %330 = vmatprep.subr.mxu0 0.0
    %331 = vmatpush1.msra.mxu0 %v273
    %332 = vmatprep.subr.mxu0 0.0
    %333 = vmatpush1.msra.mxu0 %v272
    %334 = vmatprep.subr.mxu0 0.0
    %335 = vmatpush1.msra.mxu0 %v271
    %336 = vmatprep.subr.mxu0 0.0
    %337 = vmatpush1.msra.mxu0 %v270
    %338 = vmatprep.subr.mxu0 0.0
    %339 = vmatpush1.msra.mxu0 %v269
    %340 = vmatprep.subr.mxu0 0.0
    %341 = vmatpush1.msra.mxu0 %v268
    %342 = vmatprep.subr.mxu0 0.0
    %343 = vmatpush2.msra.mxu0 0.0
    %344 = vmatprep.subr.mxu0 0.0
    %345 = vmatpush2.msra.mxu0 0.0
    %346 = vmatprep.subr.mxu0 0.0
    %347 = vmatpush2.msra.mxu0 0.0
    %348 = vmatprep.subr.mxu0 0.0
    %349 = vmatpush2.msra.mxu0 0.0
    %350 = vmatprep.subr.mxu0 0.0
    %351 = vmatpush2.msra.mxu0 0.0
    %352 = vmatprep.subr.mxu0 0.0
    %353 = vmatpush2.msra.mxu0 0.0
    %354 = vmatprep.subr.mxu0 0.0
    %355 = vmatpush2.msra.mxu0 0.0
    %356 = vmatprep.subr.mxu0 0.0
    %357 = vmatpush2.msra.mxu0 0.0
    %358 = vmatprep.subr.mxu0 0.0
    %359 = vmatpush2.msra.mxu0 0.0
    %360 = vmatprep.subr.mxu0 0.0
    %361 = vmatpush2.msra.mxu0 0.0
    %362 = vmatprep.subr.mxu0 0.0
    %363 = vmatpush2.msra.mxu0 0.0
    %364 = vmatprep.subr.mxu0 0.0
    %365 = vmatpush2.msra.mxu0 0.0
    %366 = vmatprep.subr.mxu0 0.0
    %367 = vmatpush2.msra.mxu0 0.0
    %368 = vmatprep.subr.mxu0 0.0
    %369 = vmatpush2.msra.mxu0 0.0
    %370 = vmatprep.subr.mxu0 0.0
    %371 = vmatpush2.msra.mxu0 0.0
    %372 = vmatprep.subr.mxu0 0.0
    %373 = vmatpush2.msra.mxu0 0.0
    %374 = vmatprep.mubr.f32.mxu0 0.0
    %375 = vmatmul.mubr.f32.gmra.mxu0 %v298
    %v376 = vpop.f32.mrf.mxu0
    %v377 = vadd.f32 %v284, %v376
    %v378 = vpop.f32.mrf.mxu0
    %379 = vmatprep.mubr.f32.mxu0 0.0
    %380 = vmatmul.mubr.f32.gmra.mxu0 %v301
    %v381 = vpop.f32.mrf.mxu0
    %v382 = vadd.f32 %v289, %v381
    %v383 = vpop.f32.mrf.mxu0
    %384 = vmatprep.mubr.f32.mxu0 0.0
    %385 = vmatmul.mubr.f32.gmra.mxu0 %v304
    %v386 = vpop.f32.mrf.mxu0
    %v387 = vadd.f32 %v294, %v386
    %v388 = vpop.f32.mrf.mxu0
    %389 = vdwg.mxu0
    %v390 = vmul.f32 %v377, 0.01
    %v391 = vmul.f32 %v382, 0.01
    %v392 = vmul.f32 %v387, 0.01
    %v393 = vmax.f32 %v377, %v390
    %v394 = vmax.f32 %v382, %v391
    %v395 = vmax.f32 %v387, %v392
    %v396 = vld [vmem:[%s5] sm:$0x7]
    %v397 = vld [vmem:[%s6] sm:$0x7]
    %399 = vset.pattern.permute.xlu0 0
    %400 = vperm.xlu0 %399, %v397
    %v401 = vpop.permute.xlu0 %400
    %vm403 = vcmask 162816
    %v405 = vsel %vm403, %v396, 0
    %vm407 = vcmask 1043456
    %v409 = vsel %vm407, %v395, 0
    %411 = vmatprep.subr.mxu0 0.0
    %412 = vmatpush1.msra.mxu0 0.0
    %413 = vmatprep.subr.mxu0 0.0
    %414 = vmatpush1.msra.mxu0 0.0
    %415 = vmatprep.subr.mxu0 0.0
    %416 = vmatpush1.msra.mxu0 0.0
    %417 = vmatprep.subr.mxu0 0.0
    %418 = vmatpush1.msra.mxu0 0.0
    %419 = vmatprep.subr.mxu0 0.0
    %420 = vmatpush1.msra.mxu0 0.0
    %421 = vmatprep.subr.mxu0 0.0
    %422 = vmatpush1.msra.mxu0 0.0
    %423 = vmatprep.subr.mxu0 0.0
    %424 = vmatpush1.msra.mxu0 0.0
    %425 = vmatprep.subr.mxu0 0.0
    %426 = vmatpush1.msra.mxu0 0.0
    %427 = vmatprep.subr.mxu0 0.0
    %428 = vmatpush1.msra.mxu0 0.0
    %429 = vmatprep.subr.mxu0 0.0
    %430 = vmatpush1.msra.mxu0 0.0
    %431 = vmatprep.subr.mxu0 0.0
    %432 = vmatpush1.msra.mxu0 0.0
    %433 = vmatprep.subr.mxu0 0.0
    %434 = vmatpush1.msra.mxu0 0.0
    %435 = vmatprep.subr.mxu0 0.0
    %436 = vmatpush1.msra.mxu0 0.0
    %437 = vmatprep.subr.mxu0 0.0
    %438 = vmatpush1.msra.mxu0 %v409
    %439 = vmatprep.subr.mxu0 0.0
    %440 = vmatpush1.msra.mxu0 %v394
    %441 = vmatprep.subr.mxu0 0.0
    %442 = vmatpush1.msra.mxu0 %v393
    %443 = vmatprep.subr.mxu0 0.0
    %444 = vmatpush2.msra.mxu0 0.0
    %445 = vmatprep.subr.mxu0 0.0
    %446 = vmatpush2.msra.mxu0 0.0
    %447 = vmatprep.subr.mxu0 0.0
    %448 = vmatpush2.msra.mxu0 0.0
    %449 = vmatprep.subr.mxu0 0.0
    %450 = vmatpush2.msra.mxu0 0.0
    %451 = vmatprep.subr.mxu0 0.0
    %452 = vmatpush2.msra.mxu0 0.0
    %453 = vmatprep.subr.mxu0 0.0
    %454 = vmatpush2.msra.mxu0 0.0
    %455 = vmatprep.subr.mxu0 0.0
    %456 = vmatpush2.msra.mxu0 0.0
    %457 = vmatprep.subr.mxu0 0.0
    %458 = vmatpush2.msra.mxu0 0.0
    %459 = vmatprep.subr.mxu0 0.0
    %460 = vmatpush2.msra.mxu0 0.0
    %461 = vmatprep.subr.mxu0 0.0
    %462 = vmatpush2.msra.mxu0 0.0
    %463 = vmatprep.subr.mxu0 0.0
    %464 = vmatpush2.msra.mxu0 0.0
    %465 = vmatprep.subr.mxu0 0.0
    %466 = vmatpush2.msra.mxu0 0.0
    %467 = vmatprep.subr.mxu0 0.0
    %468 = vmatpush2.msra.mxu0 0.0
    %469 = vmatprep.subr.mxu0 0.0
    %470 = vmatpush2.msra.mxu0 0.0
    %471 = vmatprep.subr.mxu0 0.0
    %472 = vmatpush2.msra.mxu0 0.0
    %473 = vmatprep.subr.mxu0 0.0
    %474 = vmatpush2.msra.mxu0 0.0
    %475 = vmatprep.mubr.f32.mxu0 0.0
    %476 = vmatmul.mubr.f32.gmra.mxu0 %v405
    %v477 = vpop.f32.mrf.mxu0
    %v478 = vadd.f32 %v401, %v477
    %v479 = vpop.f32.mrf.mxu0
    %480 = vdwg.mxu0
    %v481 = vmax.f32 %v478, 0.0
    %v482 = vand.u32 2147483647, %v478
    %v483 = vsub.f32 0.0, %v482
    %v484 = vmul.f32 %v483, 1.442695
    %v485 = vpow.pop %v484
    %v486 = vadd.f32 %v485, 1.0
    %v487 = vlog2.pop %v486
    %v488 = vmul.f32 %v487, 0.6931472
    %v489 = vmul.f32 -0.5, %v485
    %v490 = vadd.f32 %v489, 1.0
    %v491 = vmul.f32 %v490, %v485
    %v492 = vand.u32 2147483647, %v485
    %vm493 = vcmp.lt.f32.partialorder %v492, 0.0004427343
    %v494 = vsel %vm493, %v491, %v488
    %v495 = vadd.f32 %v481, %v494
    %v496 = vadd.f32 %v495, 0.001
    %497 = vxpose.xlu0.b32.start [1/16] %v496, 128
    %498 = vxpose.xlu0.b32.cont [2/16] 0.0, 128
    %499 = vxpose.xlu0.b32.cont [3/16] 0.0, 128
    %500 = vxpose.xlu0.b32.cont [4/16] 0.0, 128
    %501 = vxpose.xlu0.b32.cont [5/16] 0.0, 128
    %502 = vxpose.xlu0.b32.cont [6/16] 0.0, 128
    %503 = vxpose.xlu0.b32.cont [7/16] 0.0, 128
    %504 = vxpose.xlu0.b32.cont [8/16] 0.0, 128
    %505 = vxpose.xlu0.b32.cont [9/16] 0.0, 128
    %506 = vxpose.xlu0.b32.cont [10/16] 0.0, 128
    %507 = vxpose.xlu0.b32.cont [11/16] 0.0, 128
    %508 = vxpose.xlu0.b32.cont [12/16] 0.0, 128
    %509 = vxpose.xlu0.b32.cont [13/16] 0.0, 128
    %510 = vxpose.xlu0.b32.cont [14/16] 0.0, 128
    %511 = vxpose.xlu0.b32.cont [15/16] 0.0, 128
    %512 = vxpose.xlu0.b32.end [16/16] 0.0, 128
    %v513 = vpop.trf.xlu0
    %v514 = vpop.trf.xlu0
    %v515 = vpop.trf.xlu0
    %v516 = vpop.trf.xlu0
    %v517 = vpop.trf.xlu0
    %v518 = vpop.trf.xlu0
    %v519 = vpop.trf.xlu0
    %v520 = vpop.trf.xlu0
    %v521 = vpop.trf.xlu0
    %v522 = vpop.trf.xlu0
    %v523 = vpop.trf.xlu0
    %v524 = vpop.trf.xlu0
    %v525 = vpop.trf.xlu0
    %v526 = vpop.trf.xlu0
    %v527 = vpop.trf.xlu0
    %v528 = vpop.trf.xlu0
    %vm529 = vcmask 23552
    %530 = vst.msk [vmem:[#allocation2] sm:$0xff] %vm529, %v513
    %531 = vst.msk [vmem:[#allocation2 + $0x8] sm:$0xff] %vm529, %v514
    %532 = vst.msk [vmem:[#allocation2 + $0x10] sm:$0xff] %vm529, %v515
    %533 = vst.msk [vmem:[#allocation2 + $0x18] sm:$0xff] %vm529, %v516
    %534 = vst.msk [vmem:[#allocation2 + $0x20] sm:$0xff] %vm529, %v517
    %535 = vst.msk [vmem:[#allocation2 + $0x28] sm:$0xff] %vm529, %v518
    %536 = vst.msk [vmem:[#allocation2 + $0x30] sm:$0xff] %vm529, %v519
    %537 = vst.msk [vmem:[#allocation2 + $0x38] sm:$0xff] %vm529, %v520
    %538 = vst.msk [vmem:[#allocation2 + $0x40] sm:$0xff] %vm529, %v521
    %539 = vst.msk [vmem:[#allocation2 + $0x48] sm:$0xff] %vm529, %v522
    %540 = vst.msk [vmem:[#allocation2 + $0x50] sm:$0xff] %vm529, %v523
    %541 = vst.msk [vmem:[#allocation2 + $0x58] sm:$0xff] %vm529, %v524
    %542 = vst.msk [vmem:[#allocation2 + $0x60] sm:$0xff] %vm529, %v525
    %543 = vst.msk [vmem:[#allocation2 + $0x68] sm:$0xff] %vm529, %v526
    %544 = vst.msk [vmem:[#allocation2 + $0x70] sm:$0xff] %vm529, %v527
    %545 = vst.msk [vmem:[#allocation2 + $0x78] sm:$0xff] %vm529, %v528
    // Predicated region
    $region30: #{tpu_custom_call.1} parent=1 // pred_check
      _
    $region31: #{tpu_custom_call.1} parent=1 // pred_check_branch
      %547 = sbr.rel (0) target = $region33
    $region32: #{tpu_custom_call.1} parent=1 // pred_region
      // Predicated region
      $region34: #{tpu_custom_call.1} parent=32 // pred_check
        _
      $region35: #{tpu_custom_call.1} parent=32 // pred_check_branch
        %549 = sbr.rel (0) target = $region37
      $region36: #{tpu_custom_call.1} parent=32 // pred_region
        // Predicated region
        $region38: #{tpu_custom_call.1} parent=36 // pred_check
          _
        $region39: #{tpu_custom_call.1} parent=36 // pred_check_branch
          %551 = sbr.rel (0) target = $region41
        $region40: #{tpu_custom_call.1} parent=36 // pred_region
          // Predicated region
          $region53: #{tpu_custom_call.1} parent=40 // pred_check
            _
          $region54: #{tpu_custom_call.1} parent=40 // pred_check_branch
            %567 = sbr.rel (0) target = $region56
          $region55: #{tpu_custom_call.1} parent=40 // pred_region
            loop: start=0, step=1, limit=1
            $region57: #{tpu_custom_call.1} parent=55 // loop_pre_header
              _
            $region58: #{tpu_custom_call.1} parent=55 // loop_header
              %s569 = sphi 0, %s573
              %p570 = scmp.ge.s32.totalorder %s569, 1
              %s574 = sphi [#allocation2], [#allocation2]
              %s575 = sphi %s7, %s7
            $region59: #{tpu_custom_call.1} parent=55 // loop_header_branch
              %572 = sbr.rel (%p570) target = $region63
            $region60: #{tpu_custom_call.1} parent=55 // loop_body
              %v576 = vld [vmem:[%s574] sm:$0xff]
              %577 = vst [vmem:[%s575] sm:$0xff] %v576
            $region61: #{tpu_custom_call.1} parent=55 // loop_footer
              %s573 = sadd.s32 1, %s569
            $region62: #{tpu_custom_call.1} parent=55 // loop_footer_branch
              %568 = sbr.rel target = $region58
            $region63: #{tpu_custom_call.1} parent=55 // loop_exit
              _
          $region56: #{tpu_custom_call.1} parent=40 // pred_fallthru
            _
          // Predicated region
          $region64: #{tpu_custom_call.1} parent=40 // pred_check
            _
          $region65: #{tpu_custom_call.1} parent=40 // pred_check_branch
            %579 = sbr.rel target = $region67
          $region66: #{tpu_custom_call.1} parent=40 // pred_region
            _
          $region67: #{tpu_custom_call.1} parent=40 // pred_fallthru
            _
        $region41: #{tpu_custom_call.1} parent=36 // pred_fallthru
          _
        // Predicated region
        $region42: #{tpu_custom_call.1} parent=36 // pred_check
          _
        $region43: #{tpu_custom_call.1} parent=36 // pred_check_branch
          %553 = sbr.rel target = $region45
        $region44: #{tpu_custom_call.1} parent=36 // pred_region
          %s555 = ssub.s32 256, 1
          loop: start=0, step=1, limit=1
          $region46: #{tpu_custom_call.1} parent=44 // loop_pre_header
            _
          $region47: #{tpu_custom_call.1} parent=44 // loop_header
            %s557 = sphi 0, %s561
            %p558 = scmp.ge.s32.totalorder %s557, 1
            %s562 = sphi [#allocation2], [#allocation2]
            %s563 = sphi %s7, %s7
          $region48: #{tpu_custom_call.1} parent=44 // loop_header_branch
            %560 = sbr.rel (%p558) target = $region52
          $region49: #{tpu_custom_call.1} parent=44 // loop_body
            %v564 = vld [vmem:[%s562] sm:%s555]
            %565 = vst [vmem:[%s563] sm:%s555] %v564
          $region50: #{tpu_custom_call.1} parent=44 // loop_footer
            %s561 = sadd.s32 1, %s557
          $region51: #{tpu_custom_call.1} parent=44 // loop_footer_branch
            %556 = sbr.rel target = $region47
          $region52: #{tpu_custom_call.1} parent=44 // loop_exit
            _
        $region45: #{tpu_custom_call.1} parent=36 // pred_fallthru
          _
      $region37: #{tpu_custom_call.1} parent=32 // pred_fallthru
        _
      %580 = vnop
    $region33: #{tpu_custom_call.1} parent=1 // pred_fallthru
      _
    // Predicated region
    $region68: #{tpu_custom_call.1} parent=1 // pred_check
      _
    $region69: #{tpu_custom_call.1} parent=1 // pred_check_branch
      %582 = sbr.rel (0) target = $region71
    $region70: #{tpu_custom_call.1} parent=1 // pred_region
      _
    $region71: #{tpu_custom_call.1} parent=1 // pred_fallthru
      _

</llo_original>
